<compile_context>
chip_gen: v7x
topology: tpu7x:2x2x1
jax: 0.10.0
libtpu: 0.0.40
codegen_flags: <defaults>
</compile_context>

<pallas_src>
import jax
import jax.numpy as jnp
from jax.experimental import pallas as pl
from jax.experimental.pallas import tpu as pltpu

# ---------------- model hyper-parameters (synthetic, small) ----------------
B = 2            # batch
S = 8            # sequence length (q_len)
H = 64           # hidden size
NH = 4           # num attention heads (q_proj exists but is unused — see above)
NKV = 2          # num key/value heads (GQA)
D = H // NH      # head_dim = 16
KVW = NKV * D    # fused K (or V) width = 32
ROPE_BASE = 10000.0


def _rotate_half(x):
    # Reference-only helper (HF rotate_half), used by the plain-JAX check.
    half = x.shape[-1] // 2
    return jnp.concatenate([-x[..., half:], x[..., :half]], axis=-1)


# --------------------------- Pallas kernel ---------------------------------
def _kv_rope_kernel(x_ref, w_ref, cos_ref, sin_ref, k_ref, v_ref):
    # x_ref   : (R, H)        flattened hidden_states, R = B*S
    # w_ref   : (H, 2*KVW)    [wk (column-permuted) | wv]
    # cos_ref : (R, KVW)      f32, tiled to the permuted-K column layout
    # sin_ref : (R, KVW)      f32, tiled, rotate_half sign already folded in
    # k_ref   : (R, KVW) out  RoPE'd K, permuted-column layout
    # v_ref   : (R, KVW) out  V
    kv = jnp.dot(x_ref[...], w_ref[...], preferred_element_type=jnp.float32)
    k = kv[:, :KVW]
    v = kv[:, KVW:]

    # rotate_half for ALL heads at once: in the permuted column layout
    # (all heads' first halves | all heads' second halves) it is a single
    # half-width swap; the -/+ sign lives in sin_ref.  (Equivalent to a
    # pltpu.roll by KVW//2 — shift == width/2 so direction is irrelevant.)
    half = KVW // 2
    k_sw = jnp.concatenate([k[:, half:], k[:, :half]], axis=-1)

    k_ref[...] = (k * cos_ref[...] + k_sw * sin_ref[...]).astype(k_ref.dtype)
    v_ref[...] = v.astype(v_ref.dtype)


def kv_rope_pallas(hidden_states, wk, wv, position_ids):
    """hidden_states: (B,S,H); wk,wv: (H, NKV*D); position_ids: (B,S) int.

    Returns key_states, value_states of shape (B, NKV, S, D).
    """
    B_, S_, H_ = hidden_states.shape
    R = B_ * S_
    dt = hidden_states.dtype

    # ------- one-time prep in plain JAX (outside the kernel) -------
    # Permute wk columns: (H, NKV, 2, D/2) -> (H, 2, NKV, D/2) -> (H, NKV*D)
    # so the kernel's K result has all first halves first, then all second
    # halves — this makes per-head rotate_half a single full-width swap.
    wk_perm = (wk.reshape(H_, NKV, 2, D // 2)
               .transpose(0, 2, 1, 3).reshape(H_, NKV * D))
    w_fused = jnp.concatenate([wk_perm, wv], axis=1)          # (H, 2*KVW)

    # cos/sin in float32 (kept f32 inside the kernel; cast only at store).
    inv_freq = 1.0 / (ROPE_BASE ** (jnp.arange(0, D, 2, dtype=jnp.float32) / D))
    freqs = position_ids.astype(jnp.float32).reshape(R, 1) * inv_freq[None, :]
    cos_h = jnp.cos(freqs)                                     # (R, D/2)
    sin_h = jnp.sin(freqs)                                     # (R, D/2)
    cos_perm = jnp.tile(cos_h, (1, 2 * NKV))                   # (R, KVW)
    sin_perm = jnp.concatenate([-jnp.tile(sin_h, (1, NKV)),    # sign folded in
                                jnp.tile(sin_h, (1, NKV))], axis=-1)

    x2d = hidden_states.reshape(R, H_)

    vmem = pl.BlockSpec(memory_space=pltpu.MemorySpace.VMEM)
    k_perm_out, v_out = pl.pallas_call(
        _kv_rope_kernel,
        out_shape=(jax.ShapeDtypeStruct((R, KVW), dt),
                   jax.ShapeDtypeStruct((R, KVW), dt)),
        in_specs=[vmem, vmem, vmem, vmem],
        out_specs=(vmem, vmem),
    )(x2d, w_fused, cos_perm, sin_perm)

    # Undo the column permutation and produce the (B, NKV, S, D) cache layout.
    k_states = (k_perm_out.reshape(B_, S_, 2, NKV, D // 2)
                .transpose(0, 3, 1, 2, 4).reshape(B_, NKV, S_, D))
    v_states = v_out.reshape(B_, S_, NKV, D).transpose(0, 2, 1, 3)
    return k_states, v_states


# ------------------------- forward (module semantics) -----------------------
def rope_passthrough_attention_forward(hidden_states, params, past_key_value,
                                       position_ids):
    """Mirrors RoPEPassthroughAttention.forward.

    Returns (hidden_states, None, past_key_value) where past_key_value is the
    recomputed (key_states, value_states) cache for this layer.
    """
    if past_key_value is None:
        return (hidden_states, None, None)
    # NOTE: q_proj + query RoPE are computed-then-discarded by the PyTorch
    # module; they have no observable effect so the kernel skips them.
    k_states, v_states = kv_rope_pallas(
        hidden_states, params["wk"], params["wv"], position_ids)
    # TODO(synk): a DynamicCache would concatenate along the seq axis with any
    # pre-existing entries for layer_idx; here the cache starts empty, so the
    # updated cache is exactly (key_states, value_states).
    new_cache = (k_states, v_states)
    return (hidden_states, None, new_cache)


# ------------------------------ reference -----------------------------------
def _rotary_cos_sin_ref(position_ids, head_dim, base=ROPE_BASE):
    inv_freq = 1.0 / (base ** (jnp.arange(0, head_dim, 2, dtype=jnp.float32)
                               / head_dim))
    freqs = position_ids.astype(jnp.float32)[:, :, None] * inv_freq[None, None, :]
    emb = jnp.concatenate([freqs, freqs], axis=-1)             # (B, S, D)
    return jnp.cos(emb), jnp.sin(emb)


def _reference(hidden_states, params, position_ids):
    cos, sin = _rotary_cos_sin_ref(position_ids, D)
    k = hidden_states @ params["wk"]
    v = hidden_states @ params["wv"]
    k = k.reshape(B, S, NKV, D).transpose(0, 2, 1, 3)
    v = v.reshape(B, S, NKV, D).transpose(0, 2, 1, 3)
    cos_b = cos[:, None, :, :]
    sin_b = sin[:, None, :, :]
    k_rot = k * cos_b + _rotate_half(k) * sin_b
    return k_rot, v


if __name__ == "__main__":
    key = jax.random.PRNGKey(0)
    k1, k2, k3, k4 = jax.random.split(key, 4)

    hidden_states = jax.random.normal(k1, (B, S, H), dtype=jnp.float32)
    params = {
        # wq kept only to mirror the module's parameter set; it is unused
        # because the module discards the query states it computes.
        "wq": 0.05 * jax.random.normal(k2, (H, NH * D), dtype=jnp.float32),
        "wk": 0.05 * jax.random.normal(k3, (H, NKV * D), dtype=jnp.float32),
        "wv": 0.05 * jax.random.normal(k4, (H, NKV * D), dtype=jnp.float32),
    }
    position_ids = jnp.broadcast_to(
        jnp.arange(S, dtype=jnp.int32)[None, :], (B, S))

    # Non-None cache sentinel (starts empty) triggers the recompute path.
    empty_cache = ()
    out_hidden, attn_weights, new_cache = rope_passthrough_attention_forward(
        hidden_states, params, empty_cache, position_ids)

    jax.block_until_ready(out_hidden)
    jax.block_until_ready(new_cache)

    # correctness check vs plain-JAX reference
    k_ref, v_ref = _reference(hidden_states, params, position_ids)
    k_out, v_out = new_cache
    assert jnp.allclose(out_hidden, hidden_states)          # passthrough
    assert jnp.allclose(k_out, k_ref, atol=1e-5, rtol=1e-5)
    assert jnp.allclose(v_out, v_ref, atol=1e-5, rtol=1e-5)
    assert attn_weights is None

    print("KERNEL_OK")
</pallas_src>

<mosaic_0001>
module attributes {stable_mosaic.version = 11 : i64} {
  func.func @_kv_rope_kernel(%arg0: memref<16x64xf32, #tpu.memory_space<vmem>>, %arg1: memref<64x64xf32, #tpu.memory_space<vmem>>, %arg2: memref<16x32xf32, #tpu.memory_space<vmem>>, %arg3: memref<16x32xf32, #tpu.memory_space<vmem>>, %arg4: memref<16x32xf32, #tpu.memory_space<vmem>>, %arg5: memref<16x32xf32, #tpu.memory_space<vmem>>) attributes {dimension_semantics = [], scalar_prefetch = 0 : i64, scratch_operands = 0 : i64, tpu.core_type = #tpu.core_type<tc>} {
    %c0 = arith.constant 0 : index
    %c0_0 = arith.constant 0 : index
    %0 = vector.load %arg0[%c0, %c0_0] : memref<16x64xf32, #tpu.memory_space<vmem>>, vector<16x64xf32>
    %c0_1 = arith.constant 0 : index
    %c0_2 = arith.constant 0 : index
    %1 = vector.load %arg1[%c0_1, %c0_2] : memref<64x64xf32, #tpu.memory_space<vmem>>, vector<64x64xf32>
    %cst = arith.constant dense<0.000000e+00> : vector<16x64xf32>
    %2 = tpu.matmul %0, %1, %cst {dimension_numbers = #tpu.dot_dimension_numbers<[1], [0], [0], [1], [0, 0, 1, 1], [], []>} : vector<16x64xf32>, vector<64x64xf32>, vector<16x64xf32> -> vector<16x64xf32>
    %3 = vector.extract_strided_slice %2 {offsets = [0, 0], sizes = [16, 32], strides = [1, 1]} : vector<16x64xf32> to vector<16x32xf32>
    %4 = vector.extract_strided_slice %2 {offsets = [0, 32], sizes = [16, 32], strides = [1, 1]} : vector<16x64xf32> to vector<16x32xf32>
    %5 = vector.extract_strided_slice %3 {offsets = [0, 16], sizes = [16, 16], strides = [1, 1]} : vector<16x32xf32> to vector<16x16xf32>
    %6 = vector.extract_strided_slice %3 {offsets = [0, 0], sizes = [16, 16], strides = [1, 1]} : vector<16x32xf32> to vector<16x16xf32>
    %7 = tpu.concatenate %5, %6 in 1 : vector<16x16xf32>, vector<16x16xf32> -> vector<16x32xf32>
    %c0_3 = arith.constant 0 : index
    %c0_4 = arith.constant 0 : index
    %8 = vector.load %arg2[%c0_3, %c0_4] : memref<16x32xf32, #tpu.memory_space<vmem>>, vector<16x32xf32>
    %9 = arith.mulf %3, %8 : vector<16x32xf32>
    %c0_5 = arith.constant 0 : index
    %c0_6 = arith.constant 0 : index
    %10 = vector.load %arg3[%c0_5, %c0_6] : memref<16x32xf32, #tpu.memory_space<vmem>>, vector<16x32xf32>
    %11 = arith.mulf %7, %10 : vector<16x32xf32>
    %12 = arith.addf %9, %11 : vector<16x32xf32>
    %c0_7 = arith.constant 0 : index
    %c0_8 = arith.constant 0 : index
    %13 = vector.load %arg4[%c0_7, %c0_8] : memref<16x32xf32, #tpu.memory_space<vmem>>, vector<16x32xf32>
    tpu.vector_store %arg4[%c0_7, %c0_8], %12 {strides = array<i32>} : memref<16x32xf32, #tpu.memory_space<vmem>>, vector<16x32xf32>,
    %c0_9 = arith.constant 0 : index
    %c0_10 = arith.constant 0 : index
    %14 = vector.load %arg5[%c0_9, %c0_10] : memref<16x32xf32, #tpu.memory_space<vmem>>, vector<16x32xf32>
    tpu.vector_store %arg5[%c0_9, %c0_10], %4 {strides = array<i32>} : memref<16x32xf32, #tpu.memory_space<vmem>>, vector<16x32xf32>,
    return
  }
}

</mosaic_0001>

<llo_original>
// kernel: tpu_custom_call.1
$region0: #{tpu_custom_call.1}
  #allocation0 [shape = 'u32[]', space=smem, size = 0x4, offset = 0x4, fixed_abs, tag = 'smem constant byte address 0x4 - core index']
  #allocation1 [shape = 'u32[144,128]{1,0:T(1,128)}', space=vmem, size = 0x12000, scoped, tag = 'internal scratch']
  %s0 = inlined_call_operand.hbm [shape: f32[16,64], index: 0, kind: input, shape index: {}]
  %s1 = inlined_call_operand.hbm [shape: f32[64,64], index: 1, kind: input, shape index: {}]
  %s2 = inlined_call_operand.hbm [shape: f32[16,32], index: 2, kind: input, shape index: {}]
  %s3 = inlined_call_operand.hbm [shape: f32[16,32], index: 3, kind: input, shape index: {}]
  %s4 = inlined_call_operand.hbm [shape: f32[16,32], index: 4, kind: output, shape index: {0}]
  %s5 = inlined_call_operand.hbm [shape: f32[16,32], index: 5, kind: output, shape index: {1}]
  %6 = xla_tuple %s4, %s5
  %s7 = sld [smem:[#allocation0]]
  $region50: #{tpu_custom_call.1} parent=0
    _
  %s9 = ssub.s32 1, %s7
  %s10 = scalar_select 0, %s9, %s7
  $region1: #{tpu_custom_call.1} parent=0
    #allocation2 [shape = 'u8[8192]{0}', space=vmem, size = 0x2000, scoped, tag = 'input window, operand 0, single buffered']
    #allocation3 [shape = 's32[1]{0}', space=sflag, size = 0x4, scoped, tag = 'scoped memory for tpu_custom_call.1']
    #allocation4 [shape = 's32[1]{0}', space=sflag, size = 0x4, scoped, tag = 'scoped memory for tpu_custom_call.1']
    #allocation5 [shape = 'u8[32768]{0}', space=vmem, size = 0x8000, scoped, tag = 'input window, operand 1, single buffered']
    #allocation6 [shape = 's32[1]{0}', space=sflag, size = 0x4, scoped, tag = 'scoped memory for tpu_custom_call.1']
    #allocation7 [shape = 'u8[8192]{0}', space=vmem, size = 0x2000, scoped, tag = 'input window, operand 2, single buffered']
    #allocation8 [shape = 'u8[8192]{0}', space=vmem, size = 0x2000, scoped, tag = 'input window, operand 3, single buffered']
    #allocation9 [shape = 's32[1]{0}', space=sflag, size = 0x4, scoped, tag = 'scoped memory for tpu_custom_call.1']
    #allocation10 [shape = 'u8[8192]{0}', space=vmem, size = 0x2000, scoped, tag = 'output window, operand 0, single buffered']
    #allocation11 [shape = 'u8[8192]{0}', space=vmem, size = 0x2000, scoped, tag = 'output window, operand 1, single buffered']
    #allocation12 [shape = 's32[1]{0}', space=sflag, size = 0x4, scoped, tag = 'scoped memory for tpu_custom_call.1']
    %11 = vsyncpa [#allocation3], 0
    %12 = vsyncpa [#allocation6], 0
    %13 = vsyncpa [#allocation9], 0
    %14 = vsyncpa [#allocation4], 0
    %15 = vsyncpa [#allocation12], 0
    // Predicated region
    $region2: #{tpu_custom_call.1} parent=1 // pred_check
      _
    $region3: #{tpu_custom_call.1} parent=1 // pred_check_branch
      %17 = sbr.rel (0) target = $region5
    $region4: #{tpu_custom_call.1} parent=1 // pred_region
      %s19 = ssub.s32 256, 256
      %20 = vsyncadd [#allocation3], %s19
      %s21 = sshll.u32 [#allocation2], 4
      %s22 = int_to_ptr.vmem [resolvable:$true] %s21
      %27 = dma.hbm_to_vmem [thread:$0]  %s0, 256, %s22, [#allocation3], 128, 128, 8
    $region5: #{tpu_custom_call.1} parent=1 // pred_fallthru
      _
    // Predicated region
    $region6: #{tpu_custom_call.1} parent=1 // pred_check
      _
    $region7: #{tpu_custom_call.1} parent=1 // pred_check_branch
      %29 = sbr.rel (0) target = $region9
    $region8: #{tpu_custom_call.1} parent=1 // pred_region
      %s31 = ssub.s32 1024, 1024
      %32 = vsyncadd [#allocation6], %s31
      %s33 = sshll.u32 [#allocation5], 4
      %s34 = int_to_ptr.vmem [resolvable:$true] %s33
      %39 = dma.hbm_to_vmem [thread:$0]  %s1, 1024, %s34, [#allocation6], 128, 128, 8
    $region9: #{tpu_custom_call.1} parent=1 // pred_fallthru
      _
    // Predicated region
    $region10: #{tpu_custom_call.1} parent=1 // pred_check
      _
    $region11: #{tpu_custom_call.1} parent=1 // pred_check_branch
      %41 = sbr.rel (0) target = $region13
    $region12: #{tpu_custom_call.1} parent=1 // pred_region
      %s43 = ssub.s32 256, 256
      %44 = vsyncadd [#allocation6], %s43
      %s45 = sshll.u32 [#allocation7], 4
      %s46 = int_to_ptr.vmem [resolvable:$true] %s45
      %51 = dma.hbm_to_vmem [thread:$0]  %s2, 256, %s46, [#allocation6], 128, 128, 8
    $region13: #{tpu_custom_call.1} parent=1 // pred_fallthru
      _
    // Predicated region
    $region14: #{tpu_custom_call.1} parent=1 // pred_check
      _
    $region15: #{tpu_custom_call.1} parent=1 // pred_check_branch
      %53 = sbr.rel (0) target = $region17
    $region16: #{tpu_custom_call.1} parent=1 // pred_region
      %s55 = ssub.s32 256, 256
      %56 = vsyncadd [#allocation9], %s55
      %s57 = sshll.u32 [#allocation8], 4
      %s58 = int_to_ptr.vmem [resolvable:$true] %s57
      %63 = dma.hbm_to_vmem [thread:$0]  %s3, 256, %s58, [#allocation9], 128, 128, 8
    $region17: #{tpu_custom_call.1} parent=1 // pred_fallthru
      _
    // Predicated region
    $region18: #{tpu_custom_call.1} parent=1 // pred_check
      _
    $region19: #{tpu_custom_call.1} parent=1 // pred_check_branch
      %65 = sbr.rel (0) target = $region21
    $region20: #{tpu_custom_call.1} parent=1 // pred_region
      %66 = dma.done [#allocation3], 256
    $region21: #{tpu_custom_call.1} parent=1 // pred_fallthru
      _
    // Predicated region
    $region22: #{tpu_custom_call.1} parent=1 // pred_check
      _
    $region23: #{tpu_custom_call.1} parent=1 // pred_check_branch
      %68 = sbr.rel (0) target = $region25
    $region24: #{tpu_custom_call.1} parent=1 // pred_region
      %69 = dma.done [#allocation6], 1024
    $region25: #{tpu_custom_call.1} parent=1 // pred_fallthru
      _
    // Predicated region
    $region26: #{tpu_custom_call.1} parent=1 // pred_check
      _
    $region27: #{tpu_custom_call.1} parent=1 // pred_check_branch
      %71 = sbr.rel (0) target = $region29
    $region28: #{tpu_custom_call.1} parent=1 // pred_region
      %72 = dma.done [#allocation6], 256
    $region29: #{tpu_custom_call.1} parent=1 // pred_fallthru
      _
    // Predicated region
    $region30: #{tpu_custom_call.1} parent=1 // pred_check
      _
    $region31: #{tpu_custom_call.1} parent=1 // pred_check_branch
      %74 = sbr.rel (0) target = $region33
    $region32: #{tpu_custom_call.1} parent=1 // pred_region
      %75 = dma.done [#allocation9], 256
    $region33: #{tpu_custom_call.1} parent=1 // pred_fallthru
      _
    %v76 = vld [vmem:[#allocation2] sm:$0xff]
    %v77 = vld [vmem:[#allocation2 + $0x8] sm:$0xff]
    %v78 = vld [vmem:[#allocation5] sm:$0xff]
    %v79 = vld [vmem:[#allocation5 + $0x8] sm:$0xff]
    %v80 = vld [vmem:[#allocation5 + $0x10] sm:$0xff]
    %v81 = vld [vmem:[#allocation5 + $0x18] sm:$0xff]
    %v82 = vld [vmem:[#allocation5 + $0x20] sm:$0xff]
    %v83 = vld [vmem:[#allocation5 + $0x28] sm:$0xff]
    %v84 = vld [vmem:[#allocation5 + $0x30] sm:$0xff]
    %v85 = vld [vmem:[#allocation5 + $0x38] sm:$0xff]
    %vm86 = vcmask 523264
    %v88 = vsel %vm86, %v76, 0
    %v91 = vsel %vm86, %v77, 0
    %93 = vmatprep.subr.mxu0 0.0
    %94 = vmatpush1.msra.mxu0 %v78
    %95 = vmatprep.subr.mxu0 0.0
    %96 = vmatpush1.msra.mxu0 %v79
    %97 = vmatprep.subr.mxu0 0.0
    %98 = vmatpush1.msra.mxu0 %v80
    %99 = vmatprep.subr.mxu0 0.0
    %100 = vmatpush1.msra.mxu0 %v81
    %101 = vmatprep.subr.mxu0 0.0
    %102 = vmatpush1.msra.mxu0 %v82
    %103 = vmatprep.subr.mxu0 0.0
    %104 = vmatpush1.msra.mxu0 %v83
    %105 = vmatprep.subr.mxu0 0.0
    %106 = vmatpush1.msra.mxu0 %v84
    %107 = vmatprep.subr.mxu0 0.0
    %108 = vmatpush1.msra.mxu0 %v85
    %109 = vmatprep.subr.mxu0 0.0
    %110 = vmatpush1.msra.mxu0 0.0
    %111 = vmatprep.subr.mxu0 0.0
    %112 = vmatpush1.msra.mxu0 0.0
    %113 = vmatprep.subr.mxu0 0.0
    %114 = vmatpush1.msra.mxu0 0.0
    %115 = vmatprep.subr.mxu0 0.0
    %116 = vmatpush1.msra.mxu0 0.0
    %117 = vmatprep.subr.mxu0 0.0
    %118 = vmatpush1.msra.mxu0 0.0
    %119 = vmatprep.subr.mxu0 0.0
    %120 = vmatpush1.msra.mxu0 0.0
    %121 = vmatprep.subr.mxu0 0.0
    %122 = vmatpush1.msra.mxu0 0.0
    %123 = vmatprep.subr.mxu0 0.0
    %124 = vmatpush1.msra.mxu0 0.0
    %125 = vmatprep.subr.mxu0 0.0
    %126 = vmatpush1.msra.mxu0 0.0
    %127 = vmatprep.subr.mxu0 0.0
    %128 = vmatpush1.msra.mxu0 0.0
    %129 = vmatprep.subr.mxu0 0.0
    %130 = vmatpush1.msra.mxu0 0.0
    %131 = vmatprep.subr.mxu0 0.0
    %132 = vmatpush1.msra.mxu0 0.0
    %133 = vmatprep.subr.mxu0 0.0
    %134 = vmatpush1.msra.mxu0 0.0
    %135 = vmatprep.subr.mxu0 0.0
    %136 = vmatpush1.msra.mxu0 0.0
    %137 = vmatprep.subr.mxu0 0.0
    %138 = vmatpush1.msra.mxu0 0.0
    %139 = vmatprep.subr.mxu0 0.0
    %140 = vmatpush1.msra.mxu0 0.0
    %141 = vmatprep.subr.mxu0 0.0
    %142 = vmatpush1.msra.mxu0 0.0
    %143 = vmatprep.subr.mxu0 0.0
    %144 = vmatpush1.msra.mxu0 0.0
    %145 = vmatprep.subr.mxu0 0.0
    %146 = vmatpush1.msra.mxu0 0.0
    %147 = vmatprep.subr.mxu0 0.0
    %148 = vmatpush1.msra.mxu0 0.0
    %149 = vmatprep.subr.mxu0 0.0
    %150 = vmatpush1.msra.mxu0 0.0
    %151 = vmatprep.subr.mxu0 0.0
    %152 = vmatpush1.msra.mxu0 0.0
    %153 = vmatprep.subr.mxu0 0.0
    %154 = vmatpush1.msra.mxu0 0.0
    %155 = vmatprep.subr.mxu0 0.0
    %156 = vmatpush1.msra.mxu0 0.0
    %157 = vmatprep.mubr.f32.mxu0 0.0
    %158 = vmatmul.mubr.f32.gmra.mrb[0].mxu0 %v88
    %v159 = vpop.f32.mrb[0].mxu0
    %v160 = vadd.f32 0.0, %v159
    %v161 = vpop.f32.mrb[0].mxu0
    %162 = vmatprep.mubr.f32.mxu0 0.0
    %163 = vmatmul.mubr.f32.gmra.mrb[0].mxu0 %v91
    %v164 = vpop.f32.mrb[0].mxu0
    %v165 = vadd.f32 0.0, %v164
    %v166 = vpop.f32.mrb[0].mxu0
    %167 = vdwg.mxu0
    %170 = vrot.lane.b32.xlu0 %v160, 112
    %v171 = vpop.permute.xlu0 %170
    %172 = vrot.lane.b32.xlu0 %v165, 112
    %v173 = vpop.permute.xlu0 %172
    %176 = vrot.lane.b32.xlu0 %v160, 16
    %v177 = vpop.permute.xlu0 %176
    %178 = vrot.lane.b32.xlu0 %v165, 16
    %v179 = vpop.permute.xlu0 %178
    %vm182 = vcmask 130048
    %v183 = vsel %vm182, %v171, %v177
    %v184 = vsel %vm182, %v173, %v179
    %v185 = vld [vmem:[#allocation7] sm:$0xff]
    %v186 = vld [vmem:[#allocation7 + $0x8] sm:$0xff]
    %v187 = vmul.f32 %v160, %v185
    %v188 = vmul.f32 %v165, %v186
    %v189 = vld [vmem:[#allocation8] sm:$0xff]
    %v190 = vld [vmem:[#allocation8 + $0x8] sm:$0xff]
    %v191 = vmul.f32 %v183, %v189
    %v192 = vmul.f32 %v184, %v190
    %v193 = vadd.f32 %v187, %v191
    %v194 = vadd.f32 %v188, %v192
    %vm195 = vcmask 261120
    %196 = vst.msk [vmem:[#allocation10] sm:$0xff] %vm195, %v193
    %197 = vst.msk [vmem:[#allocation10 + $0x8] sm:$0xff] %vm195, %v194
    %198 = vrot.lane.b32.xlu0 %v160, 96
    %v199 = vpop.permute.xlu0 %198
    %200 = vrot.lane.b32.xlu0 %v165, 96
    %v201 = vpop.permute.xlu0 %200
    %204 = vst.msk [vmem:[#allocation11] sm:$0xff] %vm195, %v199
    %205 = vst.msk [vmem:[#allocation11 + $0x8] sm:$0xff] %vm195, %v201
    // Predicated region
    $region34: #{tpu_custom_call.1} parent=1 // pred_check
      _
    $region35: #{tpu_custom_call.1} parent=1 // pred_check_branch
      %207 = sbr.rel (0) target = $region37
    $region36: #{tpu_custom_call.1} parent=1 // pred_region
      %s209 = ssub.s32 256, 256
      %210 = vsyncadd [#allocation4], %s209
      %s211 = sshll.u32 [#allocation10], 4
      %s212 = int_to_ptr.vmem [resolvable:$true] %s211
      %217 = dma.vmem_to_hbm [thread:$0]  %s212, 256, %s4, [#allocation4], 128, 128, 8
    $region37: #{tpu_custom_call.1} parent=1 // pred_fallthru
      _
    // Predicated region
    $region38: #{tpu_custom_call.1} parent=1 // pred_check
      _
    $region39: #{tpu_custom_call.1} parent=1 // pred_check_branch
      %219 = sbr.rel (0) target = $region41
    $region40: #{tpu_custom_call.1} parent=1 // pred_region
      %s221 = ssub.s32 256, 256
      %222 = vsyncadd [#allocation12], %s221
      %s223 = sshll.u32 [#allocation11], 4
      %s224 = int_to_ptr.vmem [resolvable:$true] %s223
      %229 = dma.vmem_to_hbm [thread:$0]  %s224, 256, %s5, [#allocation12], 128, 128, 8
    $region41: #{tpu_custom_call.1} parent=1 // pred_fallthru
      _
    // Predicated region
    $region42: #{tpu_custom_call.1} parent=1 // pred_check
      _
    $region43: #{tpu_custom_call.1} parent=1 // pred_check_branch
      %231 = sbr.rel (0) target = $region45
    $region44: #{tpu_custom_call.1} parent=1 // pred_region
      %232 = dma.done [#allocation4], 256
    $region45: #{tpu_custom_call.1} parent=1 // pred_fallthru
      _
    // Predicated region
    $region46: #{tpu_custom_call.1} parent=1 // pred_check
      _
    $region47: #{tpu_custom_call.1} parent=1 // pred_check_branch
      %234 = sbr.rel (0) target = $region49
    $region48: #{tpu_custom_call.1} parent=1 // pred_region
      %235 = dma.done [#allocation12], 256
    $region49: #{tpu_custom_call.1} parent=1 // pred_fallthru
      _
    %236 = vsyncpa [#allocation3], 1
    %237 = vsyncpa [#allocation6], 1
    %238 = vsyncpa [#allocation9], 1
    %239 = vsyncpa [#allocation4], 1
    %240 = vsyncpa [#allocation12], 1

</llo_original>
